<compile_context>
chip_gen: v7x
topology: tpu7x:2x2x1
jax: 0.10.0
libtpu: 0.0.40
codegen_flags: <defaults>
</compile_context>

<pallas_src>
import jax
import jax.numpy as jnp
from jax.experimental import pallas as pl
from jax.experimental.pallas import tpu as pltpu

# ----- problem sizes (small, consistent with the module) -----
N, CIN, H, W = 2, 4, 16, 16          # input  [N, CIN, H, W]  (NCHW)
COUT, KH, KW = 8, 3, 3               # Conv2d(4, 8, 3, padding=1, stride=1)
PAD = 1
K = CIN * KH * KW                    # im2col contraction depth = 36
HW = H * W                           # 256  (lane-dense: multiple of 128)


def _conv_kernel(p_ref, w_ref, b_ref, o_ref):
    """Single-invocation fused conv-as-matmul.

    p_ref: (N*K,    HW)  batch-stacked im2col patches, spatial on lanes (VMEM)
    w_ref: (N*COUT, N*K) block-diagonal flattened conv weight (VMEM)
    b_ref: (N*COUT, 1)   bias column, tiled per batch element (VMEM)
    o_ref: (N*COUT, HW)  NCHW-flat output (VMEM)
    """
    acc = jnp.dot(w_ref[...], p_ref[...], preferred_element_type=jnp.float32)
    o_ref[...] = (acc + b_ref[...]).astype(o_ref.dtype)


def conv2d_pallas(x_nchw, weight, bias):
    """Equivalent of nn.Conv2d(CIN, COUT, 3, padding=1)(x_nchw).

    x_nchw: (N, CIN, H, W) float32
    weight: (COUT, CIN, KH, KW) float32  (PyTorch OIHW layout)
    bias:   (COUT,) float32
    returns (N, COUT, H, W) float32
    """
    # --- layout plumbing (plain JAX): pad + im2col, lane-dense presentation ---
    x_pad = jnp.pad(x_nchw, ((0, 0), (0, 0), (PAD, PAD), (PAD, PAD)))
    taps = [x_pad[:, :, kh:kh + H, kw:kw + W]            # (N, CIN, H, W) each
            for kh in range(KH) for kw in range(KW)]
    # Stack taps right after the channel axis so the contraction index is
    # c*KH*KW + kh*KW + kw, matching weight.reshape(COUT, CIN*KH*KW).
    patches = jnp.stack(taps, axis=2).reshape(N * K, HW)   # (72, 256)

    w_flat = weight.reshape(COUT, K)                        # (8, 36)
    # Block-diagonal weight so one matmul covers every batch element:
    # row n*COUT + c holds w_flat[c] at columns n*K : (n+1)*K.
    w_bd = jnp.kron(jnp.eye(N, dtype=w_flat.dtype), w_flat)  # (16, 72)
    b_col = jnp.tile(bias, N).reshape(N * COUT, 1)            # (16, 1)

    out_flat = pl.pallas_call(
        _conv_kernel,
        out_shape=jax.ShapeDtypeStruct((N * COUT, HW), jnp.float32),
        in_specs=[
            pl.BlockSpec(memory_space=pltpu.MemorySpace.VMEM),
            pl.BlockSpec(memory_space=pltpu.MemorySpace.VMEM),
            pl.BlockSpec(memory_space=pltpu.MemorySpace.VMEM),
        ],
        out_specs=pl.BlockSpec(memory_space=pltpu.MemorySpace.VMEM),
    )(patches, w_bd, b_col)

    # Rows are already ordered (n, cout); plain reshape => NCHW, no transpose.
    return out_flat.reshape(N, COUT, H, W)


def main_wrapper_forward(x_nchw, weight, bias):
    # Main_wrapper.forward: out = self.main_layer(x); record flags are False by
    # default so no similarity/feature-dump branches execute.
    # TODO(synk): record_inter_features / record_sim branches (plt.imsave,
    # cosine/KL similarity logging) are host-side I/O and do not affect the
    # returned tensor; not implemented in-kernel.
    return conv2d_pallas(x_nchw, weight, bias)


if __name__ == "__main__":
    key = jax.random.PRNGKey(0)
    kx, kw_, kb = jax.random.split(key, 3)

    x = jax.random.normal(kx, (N, CIN, H, W), dtype=jnp.float32)
    # Deterministic synthetic parameters (shapes from nn.Conv2d(4, 8, 3)).
    fan_in = CIN * KH * KW
    bound = 1.0 / (fan_in ** 0.5)
    weight = jax.random.uniform(kw_, (COUT, CIN, KH, KW), jnp.float32,
                                minval=-bound, maxval=bound)
    bias = jax.random.uniform(kb, (COUT,), jnp.float32,
                              minval=-bound, maxval=bound)

    out = main_wrapper_forward(x, weight, bias)
    out = jax.block_until_ready(out)

    # lightweight self-check against lax reference conv
    ref = jax.lax.conv_general_dilated(
        x, weight, window_strides=(1, 1), padding=((PAD, PAD), (PAD, PAD)),
        dimension_numbers=("NCHW", "OIHW", "NCHW"),
    ) + bias.reshape(1, COUT, 1, 1)
    assert out.shape == (N, COUT, H, W)
    assert jnp.allclose(out, ref, atol=1e-4, rtol=1e-4)

    print("KERNEL_OK")
</pallas_src>

<mosaic_0001>
module attributes {stable_mosaic.version = 11 : i64} {
  func.func @_conv_kernel(%arg0: memref<72x256xf32, #tpu.memory_space<vmem>>, %arg1: memref<16x72xf32, #tpu.memory_space<vmem>>, %arg2: memref<16x1xf32, #tpu.memory_space<vmem>>, %arg3: memref<16x256xf32, #tpu.memory_space<vmem>>) attributes {dimension_semantics = [], scalar_prefetch = 0 : i64, scratch_operands = 0 : i64, tpu.core_type = #tpu.core_type<tc>} {
    %c0 = arith.constant 0 : index
    %c0_0 = arith.constant 0 : index
    %0 = vector.load %arg1[%c0, %c0_0] : memref<16x72xf32, #tpu.memory_space<vmem>>, vector<16x72xf32>
    %c0_1 = arith.constant 0 : index
    %c0_2 = arith.constant 0 : index
    %1 = vector.load %arg0[%c0_1, %c0_2] : memref<72x256xf32, #tpu.memory_space<vmem>>, vector<72x256xf32>
    %cst = arith.constant dense<0.000000e+00> : vector<16x256xf32>
    %2 = tpu.matmul %0, %1, %cst {dimension_numbers = #tpu.dot_dimension_numbers<[1], [0], [0], [1], [0, 0, 1, 1], [], []>} : vector<16x72xf32>, vector<72x256xf32>, vector<16x256xf32> -> vector<16x256xf32>
    %c0_3 = arith.constant 0 : index
    %c0_4 = arith.constant 0 : index
    %3 = vector.load %arg2[%c0_3, %c0_4] : memref<16x1xf32, #tpu.memory_space<vmem>>, vector<16x1xf32>
    %4 = vector.broadcast %3 : vector<16x1xf32> to vector<16x256xf32>
    %5 = arith.addf %2, %4 : vector<16x256xf32>
    %c0_5 = arith.constant 0 : index
    %c0_6 = arith.constant 0 : index
    %6 = vector.load %arg3[%c0_5, %c0_6] : memref<16x256xf32, #tpu.memory_space<vmem>>, vector<16x256xf32>
    tpu.vector_store %arg3[%c0_5, %c0_6], %5 {strides = array<i32>} : memref<16x256xf32, #tpu.memory_space<vmem>>, vector<16x256xf32>,
    return
  }
}

</mosaic_0001>

<llo_original>
// kernel: tpu_custom_call.1
$region0: #{tpu_custom_call.1}
  #allocation0 [shape = 'u32[]', space=smem, size = 0x4, offset = 0x4, fixed_abs, tag = 'smem constant byte address 0x4 - core index']
  #allocation1 [shape = 'u32[144,128]{1,0:T(1,128)}', space=vmem, size = 0x12000, scoped, tag = 'internal scratch']
  %s0 = inlined_call_operand.hbm [shape: f32[72,256], index: 0, kind: input, shape index: {}]
  %s1 = inlined_call_operand.vmem [shape: f32[16,72], index: 1, kind: input, shape index: {}]
  %s2 = inlined_call_operand.vmem [shape: f32[16,1], index: 2, kind: input, shape index: {}]
  %s3 = inlined_call_operand.hbm [shape: f32[16,256], index: 3, kind: output, shape index: {}]
  %s4 = sld [smem:[#allocation0]]
  $region26: #{tpu_custom_call.1} parent=0
    _
  %s6 = ssub.s32 1, %s4
  %s7 = scalar_select 0, %s6, %s4
  $region1: #{tpu_custom_call.1} parent=0
    #allocation2 [shape = 'u8[73728]{0}', space=vmem, size = 0x12000, scoped, tag = 'input window, operand 0, single buffered']
    #allocation3 [shape = 's32[1]{0}', space=sflag, size = 0x4, scoped, tag = 'scoped memory for tpu_custom_call.1']
    #allocation4 [shape = 's32[1]{0}', space=sflag, size = 0x4, scoped, tag = 'scoped memory for tpu_custom_call.1']
    #allocation5 [shape = 'u8[16384]{0}', space=vmem, size = 0x4000, scoped, tag = 'output window, operand 0, single buffered']
    %8 = vsyncpa [#allocation3], 0
    %9 = vsyncpa [#allocation4], 0
    // Predicated region
    $region2: #{tpu_custom_call.1} parent=1 // pred_check
      _
    $region3: #{tpu_custom_call.1} parent=1 // pred_check_branch
      %11 = sbr.rel (0) target = $region5
    $region4: #{tpu_custom_call.1} parent=1 // pred_region
      %s13 = ssub.s32 2304, 2304
      %14 = vsyncadd [#allocation3], %s13
      %s15 = sshll.u32 [#allocation2], 4
      %s16 = int_to_ptr.vmem [resolvable:$true] %s15
      %21 = dma.hbm_to_vmem [thread:$0]  %s0, 2304, %s16, [#allocation3], 256, 256, 16
    $region5: #{tpu_custom_call.1} parent=1 // pred_fallthru
      _
    // Predicated region
    $region6: #{tpu_custom_call.1} parent=1 // pred_check
      _
    $region7: #{tpu_custom_call.1} parent=1 // pred_check_branch
      %23 = sbr.rel (0) target = $region9
    $region8: #{tpu_custom_call.1} parent=1 // pred_region
      _
    $region9: #{tpu_custom_call.1} parent=1 // pred_fallthru
      _
    // Predicated region
    $region10: #{tpu_custom_call.1} parent=1 // pred_check
      _
    $region11: #{tpu_custom_call.1} parent=1 // pred_check_branch
      %25 = sbr.rel (0) target = $region13
    $region12: #{tpu_custom_call.1} parent=1 // pred_region
      _
    $region13: #{tpu_custom_call.1} parent=1 // pred_fallthru
      _
    // Predicated region
    $region14: #{tpu_custom_call.1} parent=1 // pred_check
      _
    $region15: #{tpu_custom_call.1} parent=1 // pred_check_branch
      %27 = sbr.rel (0) target = $region17
    $region16: #{tpu_custom_call.1} parent=1 // pred_region
      %28 = dma.done [#allocation3], 2304
    $region17: #{tpu_custom_call.1} parent=1 // pred_fallthru
      _
    %v29 = vld [vmem:[%s1] sm:$0xff]
    %v30 = vld [vmem:[%s1 + $0x8] sm:$0xff]
    %v31 = vld [vmem:[#allocation2] sm:$0xff]
    %v32 = vld [vmem:[#allocation2 + $0x8] sm:$0xff]
    %v33 = vld [vmem:[#allocation2 + $0x10] sm:$0xff]
    %v34 = vld [vmem:[#allocation2 + $0x18] sm:$0xff]
    %v35 = vld [vmem:[#allocation2 + $0x20] sm:$0xff]
    %v36 = vld [vmem:[#allocation2 + $0x28] sm:$0xff]
    %v37 = vld [vmem:[#allocation2 + $0x30] sm:$0xff]
    %v38 = vld [vmem:[#allocation2 + $0x38] sm:$0xff]
    %v39 = vld [vmem:[#allocation2 + $0x40] sm:$0xff]
    %v40 = vld [vmem:[#allocation2 + $0x48] sm:$0xff]
    %v41 = vld [vmem:[#allocation2 + $0x50] sm:$0xff]
    %v42 = vld [vmem:[#allocation2 + $0x58] sm:$0xff]
    %v43 = vld [vmem:[#allocation2 + $0x60] sm:$0xff]
    %v44 = vld [vmem:[#allocation2 + $0x68] sm:$0xff]
    %v45 = vld [vmem:[#allocation2 + $0x70] sm:$0xff]
    %v46 = vld [vmem:[#allocation2 + $0x78] sm:$0xff]
    %v47 = vld [vmem:[#allocation2 + $0x80] sm:$0xff]
    %v48 = vld [vmem:[#allocation2 + $0x88] sm:$0xff]
    %v49 = vld [vmem:[%s2] sm:$0xff]
    %v50 = vld [vmem:[%s2 + $0x8] sm:$0xff]
    %52 = vset.pattern.permute.xlu0 0
    %53 = vperm.xlu0 %52, %v49
    %v54 = vpop.permute.xlu0 %53
    %57 = vset.pattern.permute.xlu0 0
    %58 = vperm.xlu0 %57, %v50
    %v59 = vpop.permute.xlu0 %58
    %vm61 = vcmask 588800
    %v63 = vsel %vm61, %v29, 0
    %v66 = vsel %vm61, %v30, 0
    %68 = vmatprep.subr.mxu0 %v32
    %69 = vmatpush1.msra.mxu0 %v31
    %70 = vmatprep.subr.mxu0 %v34
    %71 = vmatpush1.msra.mxu0 %v33
    %72 = vmatprep.subr.mxu0 %v36
    %73 = vmatpush1.msra.mxu0 %v35
    %74 = vmatprep.subr.mxu0 %v38
    %75 = vmatpush1.msra.mxu0 %v37
    %76 = vmatprep.subr.mxu0 %v40
    %77 = vmatpush1.msra.mxu0 %v39
    %78 = vmatprep.subr.mxu0 %v42
    %79 = vmatpush1.msra.mxu0 %v41
    %80 = vmatprep.subr.mxu0 %v44
    %81 = vmatpush1.msra.mxu0 %v43
    %82 = vmatprep.subr.mxu0 %v46
    %83 = vmatpush1.msra.mxu0 %v45
    %84 = vmatprep.subr.mxu0 %v48
    %85 = vmatpush1.msra.mxu0 %v47
    %86 = vmatprep.subr.mxu0 0.0
    %87 = vmatpush1.msra.mxu0 0.0
    %88 = vmatprep.subr.mxu0 0.0
    %89 = vmatpush1.msra.mxu0 0.0
    %90 = vmatprep.subr.mxu0 0.0
    %91 = vmatpush1.msra.mxu0 0.0
    %92 = vmatprep.subr.mxu0 0.0
    %93 = vmatpush1.msra.mxu0 0.0
    %94 = vmatprep.subr.mxu0 0.0
    %95 = vmatpush1.msra.mxu0 0.0
    %96 = vmatprep.subr.mxu0 0.0
    %97 = vmatpush1.msra.mxu0 0.0
    %98 = vmatprep.subr.mxu0 0.0
    %99 = vmatpush1.msra.mxu0 0.0
    %100 = vmatprep.subr.mxu0 0.0
    %101 = vmatpush1.msra.mxu0 0.0
    %102 = vmatprep.subr.mxu0 0.0
    %103 = vmatpush1.msra.mxu0 0.0
    %104 = vmatprep.subr.mxu0 0.0
    %105 = vmatpush1.msra.mxu0 0.0
    %106 = vmatprep.subr.mxu0 0.0
    %107 = vmatpush1.msra.mxu0 0.0
    %108 = vmatprep.subr.mxu0 0.0
    %109 = vmatpush1.msra.mxu0 0.0
    %110 = vmatprep.subr.mxu0 0.0
    %111 = vmatpush1.msra.mxu0 0.0
    %112 = vmatprep.subr.mxu0 0.0
    %113 = vmatpush1.msra.mxu0 0.0
    %114 = vmatprep.subr.mxu0 0.0
    %115 = vmatpush1.msra.mxu0 0.0
    %116 = vmatprep.subr.mxu0 0.0
    %117 = vmatpush1.msra.mxu0 0.0
    %118 = vmatprep.subr.mxu0 0.0
    %119 = vmatpush1.msra.mxu0 0.0
    %120 = vmatprep.subr.mxu0 0.0
    %121 = vmatpush1.msra.mxu0 0.0
    %122 = vmatprep.subr.mxu0 0.0
    %123 = vmatpush1.msra.mxu0 0.0
    %124 = vmatprep.subr.mxu0 0.0
    %125 = vmatpush1.msra.mxu0 0.0
    %126 = vmatprep.subr.mxu0 0.0
    %127 = vmatpush1.msra.mxu0 0.0
    %128 = vmatprep.subr.mxu0 0.0
    %129 = vmatpush1.msra.mxu0 0.0
    %130 = vmatprep.subr.mxu0 0.0
    %131 = vmatpush1.msra.mxu0 0.0
    %132 = vmatprep.mubr.f32.mxu0 0.0
    %133 = vmatmul.mubr.f32.gmra.mrb[0].mxu0 %v63
    %v134 = vpop.f32.mrb[0].mxu0
    %v135 = vadd.f32 %v54, %v134
    %v136 = vpop.f32.mrb[0].mxu0
    %v137 = vadd.f32 %v54, %v136
    %138 = vmatprep.mubr.f32.mxu0 0.0
    %139 = vmatmul.mubr.f32.gmra.mrb[0].mxu0 %v66
    %v140 = vpop.f32.mrb[0].mxu0
    %v141 = vadd.f32 %v59, %v140
    %v142 = vpop.f32.mrb[0].mxu0
    %v143 = vadd.f32 %v59, %v142
    %144 = vdwg.mxu0
    %145 = vst [vmem:[#allocation5] sm:$0xff] %v135
    %146 = vst [vmem:[#allocation5 + $0x8] sm:$0xff] %v137
    %147 = vst [vmem:[#allocation5 + $0x10] sm:$0xff] %v141
    %148 = vst [vmem:[#allocation5 + $0x18] sm:$0xff] %v143
    // Predicated region
    $region18: #{tpu_custom_call.1} parent=1 // pred_check
      _
    $region19: #{tpu_custom_call.1} parent=1 // pred_check_branch
      %150 = sbr.rel (0) target = $region21
    $region20: #{tpu_custom_call.1} parent=1 // pred_region
      %s152 = ssub.s32 512, 512
      %153 = vsyncadd [#allocation4], %s152
      %s154 = sshll.u32 [#allocation5], 4
      %s155 = int_to_ptr.vmem [resolvable:$true] %s154
      %160 = dma.vmem_to_hbm [thread:$0]  %s155, 512, %s3, [#allocation4], 256, 256, 16
    $region21: #{tpu_custom_call.1} parent=1 // pred_fallthru
      _
    // Predicated region
    $region22: #{tpu_custom_call.1} parent=1 // pred_check
      _
    $region23: #{tpu_custom_call.1} parent=1 // pred_check_branch
      %162 = sbr.rel (0) target = $region25
    $region24: #{tpu_custom_call.1} parent=1 // pred_region
      %163 = dma.done [#allocation4], 512
    $region25: #{tpu_custom_call.1} parent=1 // pred_fallthru
      _
    %164 = vsyncpa [#allocation3], 1
    %165 = vsyncpa [#allocation4], 1

</llo_original>
